<compile_context>
chip_gen: v7x
topology: tpu7x:2x2x1
jax: 0.10.0
libtpu: 0.0.40
codegen_flags: <defaults>
</compile_context>

<pallas_src>
import jax
import jax.numpy as jnp
from jax.experimental import pallas as pl
from jax.experimental.pallas import tpu as pltpu


def _round_up(x, m):
    return ((x + m - 1) // m) * m


def _parser_head_kernel(ah_ref, adT_ref, lhc_ref, ldc_ref, arc_ref, lab_ref):
    # arc tile: standard (TQ,H) @ (H,TK) MXU matmul (key side pre-transposed in wrapper).
    arc_ref[0] = jnp.dot(ah_ref[0], adT_ref[0], preferred_element_type=jnp.float32)
    # label tile: broadcast-add of the two precomputed classifier partials, stored
    # directly in the final (B,S,S,L) layout (classifier bias already folded into lhc).
    lab_ref[0] = lhc_ref[0][:, None, :] + ldc_ref[0][None, :, :]


def parser_head(seq, params, *, tile=128):
    """seq: (B, S, H) hidden states. params: PyTorch-layout weights.

    Returns (arc_scores (B,S,S), label_scores (B,S,S,L)) matching the PyTorch forward.
    """
    B, S, H = seq.shape
    L = params["w_cls"].shape[0]

    seq = seq.astype(jnp.float32)

    # ---- hoisted projections (XLA): O(B*S*H^2), negligible vs the O(B*S^2*L) output ----
    lin = lambda x, w, b: jnp.dot(x, w.astype(jnp.float32).T) + b.reshape(-1).astype(jnp.float32)
    arc_h = lin(seq, params["w_arc_h"], params["b_arc_h"])              # (B,S,H)
    arc_d = lin(seq, params["w_arc_d"], params["b_arc_d"])              # (B,S,H)
    lab_h = lin(seq, params["w_lab_h"], params["b_lab_h"])              # (B,S,H)
    lab_d = lin(seq, params["w_lab_d"], params["b_lab_d"])              # (B,S,H)

    # classifier split along the concat axis (head part first, dependent part second,
    # matching torch.cat([label_h..., label_d...], dim=-1)); bias folded into the head part.
    w_cls = params["w_cls"].astype(jnp.float32)                         # (L, 2H)
    b_cls = params["b_cls"].reshape(-1).astype(jnp.float32)             # (L,)
    lab_hc = jnp.dot(lab_h, w_cls[:, :H].T) + b_cls                     # (B,S,L)
    lab_dc = jnp.dot(lab_d, w_cls[:, H:].T)                             # (B,S,L)

    # key-side arc projections pre-transposed so the kernel does a plain matmul
    arc_dT = jnp.transpose(arc_d, (0, 2, 1))                            # (B,H,S)

    # ---- sequence tiling (pad S up to a tile multiple only when needed) ----
    if S % tile == 0:
        T, S_pad = tile, S
    elif S < tile:
        T, S_pad = S, S            # single-tile path: block dims equal full array dims
    else:
        T, S_pad = tile, _round_up(S, tile)

    if S_pad != S:
        pad = S_pad - S
        arc_h = jnp.pad(arc_h, ((0, 0), (0, pad), (0, 0)))
        arc_dT = jnp.pad(arc_dT, ((0, 0), (0, 0), (0, pad)))
        lab_hc = jnp.pad(lab_hc, ((0, 0), (0, pad), (0, 0)))
        lab_dc = jnp.pad(lab_dc, ((0, 0), (0, pad), (0, 0)))

    nq = nk = S_pad // T

    grid_spec = pltpu.PrefetchScalarGridSpec(
        num_scalar_prefetch=0,
        grid=(B, nq, nk),
        in_specs=[
            pl.BlockSpec((1, T, H), lambda b, qi, kj: (b, qi, 0)),   # arc_h  query tile
            pl.BlockSpec((1, H, T), lambda b, qi, kj: (b, 0, kj)),   # arc_d^T key tile
            pl.BlockSpec((1, T, L), lambda b, qi, kj: (b, qi, 0)),   # label head partial
            pl.BlockSpec((1, T, L), lambda b, qi, kj: (b, kj, 0)),   # label dep  partial
        ],
        out_specs=[
            pl.BlockSpec((1, T, T), lambda b, qi, kj: (b, qi, kj)),
            pl.BlockSpec((1, T, T, L), lambda b, qi, kj: (b, qi, kj, 0)),
        ],
    )

    arc_scores, label_scores = pl.pallas_call(
        _parser_head_kernel,
        out_shape=(
            jax.ShapeDtypeStruct((B, S_pad, S_pad), jnp.float32),
            jax.ShapeDtypeStruct((B, S_pad, S_pad, L), jnp.float32),
        ),
        grid_spec=grid_spec,
        compiler_params=pltpu.CompilerParams(
            dimension_semantics=("parallel", "parallel", "parallel"),
            vmem_limit_bytes=48 * 1024 * 1024,
        ),
    )(arc_h, arc_dT, lab_hc, lab_dc)

    if S_pad != S:
        arc_scores = arc_scores[:, :S, :S]
        label_scores = label_scores[:, :S, :S, :]
    return arc_scores, label_scores


def reference_head(seq, params):
    """Pure-JAX reference mirroring the PyTorch forward exactly."""
    lin = lambda x, w, b: jnp.einsum("bsh,oh->bso", x, w) + b.reshape(-1)
    arc_h = lin(seq, params["w_arc_h"], params["b_arc_h"])
    arc_d = lin(seq, params["w_arc_d"], params["b_arc_d"])
    arc_scores = jnp.einsum("bih,bjh->bij", arc_h, arc_d)
    lab_h = lin(seq, params["w_lab_h"], params["b_lab_h"])
    lab_d = lin(seq, params["w_lab_d"], params["b_lab_d"])
    B, S, H = seq.shape
    feats = jnp.concatenate(
        [
            jnp.broadcast_to(lab_h[:, :, None, :], (B, S, S, H)),
            jnp.broadcast_to(lab_d[:, None, :, :], (B, S, S, H)),
        ],
        axis=-1,
    )
    label_scores = jnp.einsum("bijf,lf->bijl", feats, params["w_cls"]) + params["b_cls"].reshape(-1)
    return arc_scores, label_scores


def init_params(key, hidden_size, num_labels):
    ks = jax.random.split(key, 10)
    scale = 0.05
    return {
        "w_arc_h": scale * jax.random.normal(ks[0], (hidden_size, hidden_size), jnp.float32),
        "b_arc_h": scale * jax.random.normal(ks[1], (1, hidden_size), jnp.float32),
        "w_arc_d": scale * jax.random.normal(ks[2], (hidden_size, hidden_size), jnp.float32),
        "b_arc_d": scale * jax.random.normal(ks[3], (1, hidden_size), jnp.float32),
        "w_lab_h": scale * jax.random.normal(ks[4], (hidden_size, hidden_size), jnp.float32),
        "b_lab_h": scale * jax.random.normal(ks[5], (1, hidden_size), jnp.float32),
        "w_lab_d": scale * jax.random.normal(ks[6], (hidden_size, hidden_size), jnp.float32),
        "b_lab_d": scale * jax.random.normal(ks[7], (1, hidden_size), jnp.float32),
        "w_cls": scale * jax.random.normal(ks[8], (num_labels, 2 * hidden_size), jnp.float32),
        "b_cls": scale * jax.random.normal(ks[9], (1, num_labels), jnp.float32),
    }


def _run_case(key, B, S, H, L):
    k_seq, k_par = jax.random.split(key)
    seq = jax.random.normal(k_seq, (B, S, H), jnp.float32)
    params = init_params(k_par, H, L)

    arc_scores, label_scores = parser_head(seq, params)
    jax.block_until_ready((arc_scores, label_scores))

    arc_ref, lab_ref = reference_head(seq, params)
    assert arc_scores.shape == (B, S, S)
    assert label_scores.shape == (B, S, S, L)
    assert jnp.allclose(arc_scores, arc_ref, atol=1e-3, rtol=1e-3)
    assert jnp.allclose(label_scores, lab_ref, atol=1e-3, rtol=1e-3)


if __name__ == "__main__":
    key = jax.random.PRNGKey(0)
    k1, k2, k3 = jax.random.split(key, 3)

    # stand-in for BERT sequence_output (B, S, H): small shape (single-tile path)
    _run_case(k1, B=2, S=8, H=32, L=37)
    # larger shape exercising the multi-tile grid path
    _run_case(k2, B=2, S=256, H=64, L=37)
    # non-multiple S exercising the pad-and-trim path
    _run_case(k3, B=1, S=200, H=48, L=37)

    print("KERNEL_OK")
</pallas_src>

<mosaic_0001>
module attributes {stable_mosaic.version = 11 : i64} {
  func.func @_parser_head_kernel(%arg0: i32, %arg1: i32, %arg2: i32, %arg3: memref<1x8x32xf32, #tpu.memory_space<vmem>>, %arg4: memref<1x32x8xf32, #tpu.memory_space<vmem>>, %arg5: memref<1x8x37xf32, #tpu.memory_space<vmem>>, %arg6: memref<1x8x37xf32, #tpu.memory_space<vmem>>, %arg7: memref<1x8x8xf32, #tpu.memory_space<vmem>>, %arg8: memref<1x8x8x37xf32, #tpu.memory_space<vmem>>) attributes {dimension_semantics = [#tpu.dimension_semantics<parallel>, #tpu.dimension_semantics<parallel>, #tpu.dimension_semantics<parallel>], iteration_bounds = array<i64: 2, 1, 1>, scalar_prefetch = 0 : i64, scratch_operands = 0 : i64, tpu.core_type = #tpu.core_type<tc>, window_params = [{transform_indices = @transform_0, window_bounds = array<i64: 1, 8, 32>}, {transform_indices = @transform_1, window_bounds = array<i64: 1, 32, 8>}, {transform_indices = @transform_2, window_bounds = array<i64: 1, 8, 37>}, {transform_indices = @transform_3, window_bounds = array<i64: 1, 8, 37>}, {transform_indices = @transform_4, window_bounds = array<i64: 1, 8, 8>}, {transform_indices = @transform_5, window_bounds = array<i64: 1, 8, 8, 37>}]} {
    %c0 = arith.constant 0 : index
    %c0_0 = arith.constant 0 : index
    %c0_1 = arith.constant 0 : index
    %0 = vector.load %arg3[%c0, %c0_0, %c0_1] : memref<1x8x32xf32, #tpu.memory_space<vmem>>, vector<1x8x32xf32>
    %1 = vector.shape_cast %0 : vector<1x8x32xf32> to vector<8x32xf32>
    %c0_2 = arith.constant 0 : index
    %c0_3 = arith.constant 0 : index
    %c0_4 = arith.constant 0 : index
    %2 = vector.load %arg4[%c0_2, %c0_3, %c0_4] : memref<1x32x8xf32, #tpu.memory_space<vmem>>, vector<1x32x8xf32>
    %3 = vector.shape_cast %2 : vector<1x32x8xf32> to vector<32x8xf32>
    %cst = arith.constant dense<0.000000e+00> : vector<8x8xf32>
    %4 = tpu.matmul %1, %3, %cst {dimension_numbers = #tpu.dot_dimension_numbers<[1], [0], [0], [1], [0, 0, 1, 1], [], []>} : vector<8x32xf32>, vector<32x8xf32>, vector<8x8xf32> -> vector<8x8xf32>
    %c0_5 = arith.constant 0 : index
    %c0_6 = arith.constant 0 : index
    %c0_7 = arith.constant 0 : index
    %5 = vector.load %arg7[%c0_5, %c0_6, %c0_7] : memref<1x8x8xf32, #tpu.memory_space<vmem>>, vector<1x8x8xf32>
    %6 = vector.shape_cast %5 : vector<1x8x8xf32> to vector<8x8xf32>
    %7 = vector.shape_cast %4 : vector<8x8xf32> to vector<1x8x8xf32>
    tpu.vector_store %arg7[%c0_5, %c0_6, %c0_7], %7 {strides = array<i32>} : memref<1x8x8xf32, #tpu.memory_space<vmem>>, vector<1x8x8xf32>,
    %c0_8 = arith.constant 0 : index
    %c0_9 = arith.constant 0 : index
    %c0_10 = arith.constant 0 : index
    %8 = vector.load %arg5[%c0_8, %c0_9, %c0_10] : memref<1x8x37xf32, #tpu.memory_space<vmem>>, vector<1x8x37xf32>
    %9 = vector.shape_cast %8 : vector<1x8x37xf32> to vector<8x37xf32>
    %10 = vector.shape_cast %9 : vector<8x37xf32> to vector<8x1x37xf32>
    %c0_11 = arith.constant 0 : index
    %c0_12 = arith.constant 0 : index
    %c0_13 = arith.constant 0 : index
    %11 = vector.load %arg6[%c0_11, %c0_12, %c0_13] : memref<1x8x37xf32, #tpu.memory_space<vmem>>, vector<1x8x37xf32>
    %12 = vector.shape_cast %11 : vector<1x8x37xf32> to vector<8x37xf32>
    %13 = vector.shape_cast %12 : vector<8x37xf32> to vector<1x8x37xf32>
    %14 = vector.broadcast %10 : vector<8x1x37xf32> to vector<8x8x37xf32>
    %15 = vector.broadcast %13 : vector<1x8x37xf32> to vector<8x8x37xf32>
    %16 = arith.addf %14, %15 : vector<8x8x37xf32>
    %c0_14 = arith.constant 0 : index
    %c0_15 = arith.constant 0 : index
    %c0_16 = arith.constant 0 : index
    %c0_17 = arith.constant 0 : index
    %17 = vector.load %arg8[%c0_14, %c0_15, %c0_16, %c0_17] : memref<1x8x8x37xf32, #tpu.memory_space<vmem>>, vector<1x8x8x37xf32>
    %18 = vector.shape_cast %17 : vector<1x8x8x37xf32> to vector<8x8x37xf32>
    %19 = vector.shape_cast %16 : vector<8x8x37xf32> to vector<1x8x8x37xf32>
    tpu.vector_store %arg8[%c0_14, %c0_15, %c0_16, %c0_17], %19 {strides = array<i32>} : memref<1x8x8x37xf32, #tpu.memory_space<vmem>>, vector<1x8x8x37xf32>,
    return
  }
  func.func @transform_0(%arg0: i32, %arg1: i32, %arg2: i32) -> (i32, i32, i32) {
    %c0_i32 = arith.constant 0 : i32
    %c0_i32_0 = arith.constant 0 : i32
    return %arg0, %arg1, %c0_i32 : i32, i32, i32
  }
  func.func @transform_1(%arg0: i32, %arg1: i32, %arg2: i32) -> (i32, i32, i32) {
    %c0_i32 = arith.constant 0 : i32
    %c0_i32_0 = arith.constant 0 : i32
    return %arg0, %c0_i32, %arg2 : i32, i32, i32
  }
  func.func @transform_2(%arg0: i32, %arg1: i32, %arg2: i32) -> (i32, i32, i32) {
    %c0_i32 = arith.constant 0 : i32
    %c0_i32_0 = arith.constant 0 : i32
    return %arg0, %arg1, %c0_i32 : i32, i32, i32
  }
  func.func @transform_3(%arg0: i32, %arg1: i32, %arg2: i32) -> (i32, i32, i32) {
    %c0_i32 = arith.constant 0 : i32
    %c0_i32_0 = arith.constant 0 : i32
    return %arg0, %arg2, %c0_i32 : i32, i32, i32
  }
  func.func @transform_4(%arg0: i32, %arg1: i32, %arg2: i32) -> (i32, i32, i32) {
    %c0_i32 = arith.constant 0 : i32
    return %arg0, %arg1, %arg2 : i32, i32, i32
  }
  func.func @transform_5(%arg0: i32, %arg1: i32, %arg2: i32) -> (i32, i32, i32, i32) {
    %c0_i32 = arith.constant 0 : i32
    %c0_i32_0 = arith.constant 0 : i32
    return %arg0, %arg1, %arg2, %c0_i32 : i32, i32, i32, i32
  }
}

</mosaic_0001>

<llo_original>
// kernel: tpu_custom_call.1
$region0: #{tpu_custom_call.1}
  #allocation0 [shape = 'u32[]', space=smem, size = 0x4, offset = 0x4, fixed_abs, tag = 'smem constant byte address 0x4 - core index']
  #allocation1 [shape = 'u32[144,128]{1,0:T(1,128)}', space=vmem, size = 0x12000, scoped, tag = 'internal scratch']
  %s0 = inlined_call_operand.vmem [shape: f32[2,8,32], index: 0, kind: input, shape index: {}]
  %s1 = inlined_call_operand.vmem [shape: f32[2,32,8], index: 1, kind: input, shape index: {}]
  %s2 = inlined_call_operand.vmem [shape: f32[2,8,37], index: 2, kind: input, shape index: {}]
  %s3 = inlined_call_operand.vmem [shape: f32[2,8,37], index: 3, kind: input, shape index: {}]
  %s4 = inlined_call_operand.hbm [shape: f32[2,8,8], index: 4, kind: output, shape index: {0}]
  %s5 = inlined_call_operand.hbm [shape: f32[2,8,8,37], index: 5, kind: output, shape index: {1}]
  %6 = xla_tuple %s4, %s5
  %s7 = sld [smem:[#allocation0]]
  $region57: #{tpu_custom_call.1} parent=0
    _
  %s9 = ssub.s32 1, %s7
  %s10 = scalar_select 0, %s9, %s7
  $region1: #{tpu_custom_call.1} parent=0
    #allocation2 [shape = 'u8[8192]{0}', space=vmem, size = 0x2000, scoped, tag = 'output window, operand 0']
    #allocation3 [shape = 's32[2]{0}', space=sflag, size = 0x8, scoped, tag = 'scoped memory for tpu_custom_call.1']
    #allocation4 [shape = 'u8[65536]{0}', space=vmem, size = 0x10000, scoped, tag = 'output window, operand 1']
    #allocation5 [shape = 's32[2]{0}', space=sflag, size = 0x8, scoped, tag = 'scoped memory for tpu_custom_call.1']
    %11 = vsyncpa [#allocation3], 0
    %s12 = scalar_lea.sflag [#allocation3], 1
    %13 = vsyncpa %s12, 0
    %14 = vsyncpa [#allocation5], 0
    %s15 = scalar_lea.sflag [#allocation5], 1
    %16 = vsyncpa %s15, 0
    loop: start=0, step=1, limit=4
    $region2: #{tpu_custom_call.1} parent=1 // loop_pre_header
      _
    $region3: #{tpu_custom_call.1} parent=1 // loop_header
      %s18 = sphi 0, %s22
      %p19 = scmp.ge.s32.totalorder %s18, 4
      %s25 = sphi 0, %s44
      %s26 = sphi 0, %s40
      %s27 = sphi 0, %s36
      %s28 = sphi 0, %s25
      %s29 = sphi 0, %s26
      %s30 = sphi 0, %s27
      %s31 = sphi 0, %s28
      %s32 = sphi 0, %s29
      %s33 = sphi 0, %s30
      %s49 = sphi 0, %s51
      %s52 = sphi 0, %s49
      %s53 = sphi 0, %s52
      %s69 = sphi 0, %s53
      %s77 = sphi 0, %s79
      %s80 = sphi 0, %s77
      %s81 = sphi 0, %s80
      %s97 = sphi 0, %s81
      %s105 = sphi 0, %s107
      %s108 = sphi 0, %s105
      %s109 = sphi 0, %s108
      %s125 = sphi 0, %s109
      %s133 = sphi 0, %s135
      %s136 = sphi 0, %s133
      %s137 = sphi 0, %s136
      %s153 = sphi 0, %s137
      %s163 = sphi 0, %s165
      %s166 = sphi 0, %s163
      %s167 = sphi 0, %s166
      %s183 = sphi 0, %s167
      %s193 = sphi 0, %s195
      %s196 = sphi 0, %s193
      %s197 = sphi 0, %s196
      %s213 = sphi 0, %s197
    $region4: #{tpu_custom_call.1} parent=1 // loop_header_branch
      %21 = sbr.rel (%p19) target = $region8
    $region5: #{tpu_custom_call.1} parent=1 // loop_body
      %s23 = ssub.s32 %s18, 1
      %s24 = ssub.s32 %s18, 2
      %s34 = sadd.s32 1, %s27
      %p35 = scmp.ge.s32.totalorder %s34, 1
      %s36 = scalar_select %p35, 0, %s34
      %s37 = sadd.s32 1, %s26
      %s38 = scalar_select %p35, %s37, %s26
      %p39 = scmp.ge.s32.totalorder %s38, 1
      %s40 = scalar_select %p39, 0, %s38
      %s41 = sadd.s32 1, %s25
      %s42 = scalar_select %p39, %s41, %s25
      %p43 = scmp.ge.s32.totalorder %s42, 2
      %s44 = scalar_select %p43, 0, %s42
      %s45 = ssub.s32 %s25, %s44
      %s46 = ssub.s32 %s26, %s40
      %s47 = sor.u32 %s45, %s46
      %p48 = scmp.eq.s32.totalorder %s47, 0
      %s50 = sadd.s32 %s49, 1
      %s51 = scalar_select %p48, %s49, %s50
      %p54 = pneg %p48
      %p55 = scmp.eq.s32.totalorder %s18, 1
      %p56 = por %p54, %p55
      %p57 = scmp.ne.s32.totalorder %s49, %s52
      %p58 = scmp.eq.s32.totalorder %s18, 0
      %p59 = por %p57, %p58
      %p60 = scmp.ne.s32.totalorder %s49, %s52
      %p61 = scmp.eq.s32.totalorder %s23, 1
      %p62 = por %p60, %p61
      %p63 = scmp.ne.s32.totalorder %s52, %s53
      %p64 = scmp.eq.s32.totalorder %s23, 0
      %p65 = por %p63, %p64
      %p66 = scmp.ne.s32.totalorder %s52, %s53
      %p67 = scmp.eq.s32.totalorder %s24, 1
      %p68 = por %p66, %p67
      %p70 = scmp.ne.s32.totalorder %s53, %s69
      %p71 = scmp.eq.s32.totalorder %s24, 0
      %p72 = por %p70, %p71
      %s73 = ssub.s32 %s25, %s44
      %s74 = ssub.s32 %s27, %s36
      %s75 = sor.u32 %s73, %s74
      %p76 = scmp.eq.s32.totalorder %s75, 0
      %s78 = sadd.s32 %s77, 1
      %s79 = scalar_select %p76, %s77, %s78
      %p82 = pneg %p76
      %p83 = scmp.eq.s32.totalorder %s18, 1
      %p84 = por %p82, %p83
      %p85 = scmp.ne.s32.totalorder %s77, %s80
      %p86 = scmp.eq.s32.totalorder %s18, 0
      %p87 = por %p85, %p86
      %p88 = scmp.ne.s32.totalorder %s77, %s80
      %p89 = scmp.eq.s32.totalorder %s23, 1
      %p90 = por %p88, %p89
      %p91 = scmp.ne.s32.totalorder %s80, %s81
      %p92 = scmp.eq.s32.totalorder %s23, 0
      %p93 = por %p91, %p92
      %p94 = scmp.ne.s32.totalorder %s80, %s81
      %p95 = scmp.eq.s32.totalorder %s24, 1
      %p96 = por %p94, %p95
      %p98 = scmp.ne.s32.totalorder %s81, %s97
      %p99 = scmp.eq.s32.totalorder %s24, 0
      %p100 = por %p98, %p99
      %s101 = ssub.s32 %s25, %s44
      %s102 = ssub.s32 %s26, %s40
      %s103 = sor.u32 %s101, %s102
      %p104 = scmp.eq.s32.totalorder %s103, 0
      %s106 = sadd.s32 %s105, 1
      %s107 = scalar_select %p104, %s105, %s106
      %p110 = pneg %p104
      %p111 = scmp.eq.s32.totalorder %s18, 1
      %p112 = por %p110, %p111
      %p113 = scmp.ne.s32.totalorder %s105, %s108
      %p114 = scmp.eq.s32.totalorder %s18, 0
      %p115 = por %p113, %p114
      %p116 = scmp.ne.s32.totalorder %s105, %s108
      %p117 = scmp.eq.s32.totalorder %s23, 1
      %p118 = por %p116, %p117
      %p119 = scmp.ne.s32.totalorder %s108, %s109
      %p120 = scmp.eq.s32.totalorder %s23, 0
      %p121 = por %p119, %p120
      %p122 = scmp.ne.s32.totalorder %s108, %s109
      %p123 = scmp.eq.s32.totalorder %s24, 1
      %p124 = por %p122, %p123
      %p126 = scmp.ne.s32.totalorder %s109, %s125
      %p127 = scmp.eq.s32.totalorder %s24, 0
      %p128 = por %p126, %p127
      %s129 = ssub.s32 %s25, %s44
      %s130 = ssub.s32 %s27, %s36
      %s131 = sor.u32 %s129, %s130
      %p132 = scmp.eq.s32.totalorder %s131, 0
      %s134 = sadd.s32 %s133, 1
      %s135 = scalar_select %p132, %s133, %s134
      %p138 = pneg %p132
      %p139 = scmp.eq.s32.totalorder %s18, 1
      %p140 = por %p138, %p139
      %p141 = scmp.ne.s32.totalorder %s133, %s136
      %p142 = scmp.eq.s32.totalorder %s18, 0
      %p143 = por %p141, %p142
      %p144 = scmp.ne.s32.totalorder %s133, %s136
      %p145 = scmp.eq.s32.totalorder %s23, 1
      %p146 = por %p144, %p145
      %p147 = scmp.ne.s32.totalorder %s136, %s137
      %p148 = scmp.eq.s32.totalorder %s23, 0
      %p149 = por %p147, %p148
      %p150 = scmp.ne.s32.totalorder %s136, %s137
      %p151 = scmp.eq.s32.totalorder %s24, 1
      %p152 = por %p150, %p151
      %p154 = scmp.ne.s32.totalorder %s137, %s153
      %p155 = scmp.eq.s32.totalorder %s24, 0
      %p156 = por %p154, %p155
      %s157 = ssub.s32 %s25, %s44
      %s158 = ssub.s32 %s26, %s40
      %s159 = sor.u32 %s157, %s158
      %s160 = ssub.s32 %s27, %s36
      %s161 = sor.u32 %s159, %s160
      %p162 = scmp.eq.s32.totalorder %s161, 0
      %s164 = sadd.s32 %s163, 1
      %s165 = scalar_select %p162, %s163, %s164
      %p168 = pneg %p162
      %p169 = scmp.eq.s32.totalorder %s18, 1
      %p170 = por %p168, %p169
      %p171 = scmp.ne.s32.totalorder %s163, %s166
      %p172 = scmp.eq.s32.totalorder %s18, 0
      %p173 = por %p171, %p172
      %p174 = scmp.ne.s32.totalorder %s163, %s166
      %p175 = scmp.eq.s32.totalorder %s23, 1
      %p176 = por %p174, %p175
      %p177 = scmp.ne.s32.totalorder %s166, %s167
      %p178 = scmp.eq.s32.totalorder %s23, 0
      %p179 = por %p177, %p178
      %p180 = scmp.ne.s32.totalorder %s166, %s167
      %p181 = scmp.eq.s32.totalorder %s24, 1
      %p182 = por %p180, %p181
      %p184 = scmp.ne.s32.totalorder %s167, %s183
      %p185 = scmp.eq.s32.totalorder %s24, 0
      %p186 = por %p184, %p185
      %s187 = ssub.s32 %s25, %s44
      %s188 = ssub.s32 %s26, %s40
      %s189 = sor.u32 %s187, %s188
      %s190 = ssub.s32 %s27, %s36
      %s191 = sor.u32 %s189, %s190
      %p192 = scmp.eq.s32.totalorder %s191, 0
      %s194 = sadd.s32 %s193, 1
      %s195 = scalar_select %p192, %s193, %s194
      %p198 = pneg %p192
      %p199 = scmp.eq.s32.totalorder %s18, 1
      %p200 = por %p198, %p199
      %p201 = scmp.ne.s32.totalorder %s193, %s196
      %p202 = scmp.eq.s32.totalorder %s18, 0
      %p203 = por %p201, %p202
      %p204 = scmp.ne.s32.totalorder %s193, %s196
      %p205 = scmp.eq.s32.totalorder %s23, 1
      %p206 = por %p204, %p205
      %p207 = scmp.ne.s32.totalorder %s196, %s197
      %p208 = scmp.eq.s32.totalorder %s23, 0
      %p209 = por %p207, %p208
      %p210 = scmp.ne.s32.totalorder %s196, %s197
      %p211 = scmp.eq.s32.totalorder %s24, 1
      %p212 = por %p210, %p211
      %p214 = scmp.ne.s32.totalorder %s197, %s213
      %p215 = scmp.eq.s32.totalorder %s24, 0
      %p216 = por %p214, %p215
      %p217 = scmp.le.s32.totalorder 1, %s18
      %p218 = scmp.lt.s32.totalorder %s18, 3
      %p219 = pnand %p217, %p218
      %p220 = pneg %p219
      // Predicated region
      $region9: #{tpu_custom_call.1} parent=5 // pred_check
        _
      $region10: #{tpu_custom_call.1} parent=5 // pred_check_branch
        %222 = sbr.rel (%p219) target = $region12
      $region11: #{tpu_custom_call.1} parent=5 // pred_region
        %s223 = ssub.s32 %s18, 1
      $region12: #{tpu_custom_call.1} parent=5 // pred_fallthru
        _
      %p224 = scmp.lt.s32.totalorder %s18, 2
      // Predicated region
      $region13: #{tpu_custom_call.1} parent=5 // pred_check
        %p225 = pneg %p224
      $region14: #{tpu_custom_call.1} parent=5 // pred_check_branch
        %227 = sbr.rel (%p225) target = $region16
      $region15: #{tpu_custom_call.1} parent=5 // pred_region
        // Predicated region
        $region17: #{tpu_custom_call.1} parent=15 // pred_check
          %p228 = pneg %p59
        $region18: #{tpu_custom_call.1} parent=15 // pred_check_branch
          %230 = sbr.rel (%p228) target = $region20
        $region19: #{tpu_custom_call.1} parent=15 // pred_region
          %p231 = scmp.lt.s32.totalorder %s25, 1
          %s232 = scalar_select %p231, %s25, 1
          %p233 = scmp.lt.s32.totalorder %s26, 0
          %s234 = scalar_select %p233, %s26, 0
          %s235 = sadd.s32 %s234, %s232
          %s236 = smul.addr %s235, 8
          %s237 = scalar_lea.vmem %s0, %s236
        $region20: #{tpu_custom_call.1} parent=15 // pred_fallthru
          _
        // Predicated region
        $region21: #{tpu_custom_call.1} parent=15 // pred_check
          %p238 = pneg %p87
        $region22: #{tpu_custom_call.1} parent=15 // pred_check_branch
          %240 = sbr.rel (%p238) target = $region24
        $region23: #{tpu_custom_call.1} parent=15 // pred_region
          %p241 = scmp.lt.s32.totalorder %s25, 1
          %s242 = scalar_select %p241, %s25, 1
          %p243 = scmp.lt.s32.totalorder %s27, 0
          %s244 = scalar_select %p243, %s27, 0
          %s245 = smul.addr %s242, 4
          %s246 = sadd.s32 %s244, %s245
          %s247 = smul.addr %s246, 8
          %s248 = scalar_lea.vmem %s1, %s247
        $region24: #{tpu_custom_call.1} parent=15 // pred_fallthru
          _
        // Predicated region
        $region25: #{tpu_custom_call.1} parent=15 // pred_check
          %p249 = pneg %p115
        $region26: #{tpu_custom_call.1} parent=15 // pred_check_branch
          %251 = sbr.rel (%p249) target = $region28
        $region27: #{tpu_custom_call.1} parent=15 // pred_region
          %p252 = scmp.lt.s32.totalorder %s25, 1
          %s253 = scalar_select %p252, %s25, 1
          %p254 = scmp.lt.s32.totalorder %s26, 0
          %s255 = scalar_select %p254, %s26, 0
          %s256 = sadd.s32 %s255, %s253
          %s257 = smul.addr %s256, 8
          %s258 = scalar_lea.vmem %s2, %s257
        $region28: #{tpu_custom_call.1} parent=15 // pred_fallthru
          _
        // Predicated region
        $region29: #{tpu_custom_call.1} parent=15 // pred_check
          %p259 = pneg %p143
        $region30: #{tpu_custom_call.1} parent=15 // pred_check_branch
          %261 = sbr.rel (%p259) target = $region32
        $region31: #{tpu_custom_call.1} parent=15 // pred_region
          %p262 = scmp.lt.s32.totalorder %s25, 1
          %s263 = scalar_select %p262, %s25, 1
          %p264 = scmp.lt.s32.totalorder %s27, 0
          %s265 = scalar_select %p264, %s27, 0
          %s266 = sadd.s32 %s265, %s263
          %s267 = smul.addr %s266, 8
          %s268 = scalar_lea.vmem %s3, %s267
        $region32: #{tpu_custom_call.1} parent=15 // pred_fallthru
          _
      $region16: #{tpu_custom_call.1} parent=5 // pred_fallthru
        _
      %p269 = scmp.le.s32.totalorder 1, %s18
      %p270 = scmp.lt.s32.totalorder %s18, 3
      %p271 = pnand %p269, %p270
      %p272 = pneg %p271
      // Predicated region
      $region33: #{tpu_custom_call.1} parent=5 // pred_check
        _
      $region34: #{tpu_custom_call.1} parent=5 // pred_check_branch
        %274 = sbr.rel (%p271) target = $region36
      $region35: #{tpu_custom_call.1} parent=5 // pred_region
        %s275 = ssub.s32 %s18, 1
        %p276 = scmp.lt.s32.totalorder %s28, 1
        %s277 = scalar_select %p276, %s28, 1
        %p278 = scmp.lt.s32.totalorder %s29, 0
        %s279 = scalar_select %p278, %s29, 0
        %s280 = sadd.s32 %s279, %s277
        %s281 = smul.addr %s280, 8
        %s282 = scalar_lea.vmem %s0, %s281
        %p283 = pneg %p65
        %p284 = pneg %p62
        %p285 = scmp.lt.s32.totalorder %s28, 1
        %s286 = scalar_select %p285, %s28, 1
        %p287 = scmp.lt.s32.totalorder %s30, 0
        %s288 = scalar_select %p287, %s30, 0
        %s289 = smul.addr %s286, 4
        %s290 = sadd.s32 %s288, %s289
        %s291 = smul.addr %s290, 8
        %s292 = scalar_lea.vmem %s1, %s291
        %p293 = pneg %p93
        %p294 = pneg %p90
        %p295 = scmp.lt.s32.totalorder %s28, 1
        %s296 = scalar_select %p295, %s28, 1
        %p297 = scmp.lt.s32.totalorder %s29, 0
        %s298 = scalar_select %p297, %s29, 0
        %s299 = sadd.s32 %s298, %s296
        %s300 = smul.addr %s299, 8
        %s301 = scalar_lea.vmem %s2, %s300
        %p302 = pneg %p121
        %p303 = pneg %p118
        %p304 = scmp.lt.s32.totalorder %s28, 1
        %s305 = scalar_select %p304, %s28, 1
        %p306 = scmp.lt.s32.totalorder %s30, 0
        %s307 = scalar_select %p306, %s30, 0
        %s308 = sadd.s32 %s307, %s305
        %s309 = smul.addr %s308, 8
        %s310 = scalar_lea.vmem %s3, %s309
        %p311 = pneg %p149
        %p312 = pneg %p146
        %p313 = pneg %p179
        %p314 = pneg %p176
        %s315 = sand.u32 %s166, 1
        %s316 = scalar_lea.sflag [#allocation3], %s315
        %s317 = sand.u32 %s166, 1
        %s318 = smul.addr %s317, 8
        %s319 = scalar_lea.vmem [#allocation2], %s318
        %p320 = pneg %p209
        %p321 = pneg %p206
        %s322 = sand.u32 %s196, 1
        %s323 = scalar_lea.sflag [#allocation5], %s322
        %s324 = sand.u32 %s196, 1
        %s325 = smul.addr %s324, 64
        %s326 = scalar_lea.vmem [#allocation4], %s325
        %p327 = scmp.lt.s32.totalorder %s28, 1
        %s328 = scalar_select %p327, %s28, 1
        %p329 = scmp.lt.s32.totalorder %s29, 0
        %s330 = scalar_select %p329, %s29, 0
        %s331 = sadd.s32 %s330, %s328
        %s332 = smul.addr %s331, 8
        %s333 = scalar_lea.vmem %s0, %s332
        %p334 = scmp.lt.s32.totalorder %s28, 1
        %s335 = scalar_select %p334, %s28, 1
        %p336 = scmp.lt.s32.totalorder %s30, 0
        %s337 = scalar_select %p336, %s30, 0
        %s338 = smul.addr %s335, 4
        %s339 = sadd.s32 %s337, %s338
        %s340 = smul.addr %s339, 8
        %s341 = scalar_lea.vmem %s1, %s340
        %p342 = scmp.lt.s32.totalorder %s28, 1
        %s343 = scalar_select %p342, %s28, 1
        %p344 = scmp.lt.s32.totalorder %s29, 0
        %s345 = scalar_select %p344, %s29, 0
        %s346 = sadd.s32 %s345, %s343
        %s347 = smul.addr %s346, 8
        %s348 = scalar_lea.vmem %s2, %s347
        %p349 = scmp.lt.s32.totalorder %s28, 1
        %s350 = scalar_select %p349, %s28, 1
        %p351 = scmp.lt.s32.totalorder %s30, 0
        %s352 = scalar_select %p351, %s30, 0
        %s353 = sadd.s32 %s352, %s350
        %s354 = smul.addr %s353, 8
        %s355 = scalar_lea.vmem %s3, %s354
        %s356 = smul.u32 8, %s29
        %v357 = vld [vmem:[%s333] sm:$0xff]
        %v358 = vld [vmem:[%s341] sm:$0xff]
        %v359 = vld [vmem:[%s341 + $0x8] sm:$0xff]
        %v360 = vld [vmem:[%s341 + $0x10] sm:$0xff]
        %v361 = vld [vmem:[%s341 + $0x18] sm:$0xff]
        %vm362 = vcmask 261120
        %v364 = vsel %vm362, %v357, 0
        %366 = vmatprep.subr.mxu0 0.0
        %367 = vmatpush1.msra.mxu0 %v358
        %368 = vmatprep.subr.mxu0 0.0
        %369 = vmatpush1.msra.mxu0 %v359
        %370 = vmatprep.subr.mxu0 0.0
        %371 = vmatpush1.msra.mxu0 %v360
        %372 = vmatprep.subr.mxu0 0.0
        %373 = vmatpush1.msra.mxu0 %v361
        %374 = vmatprep.subr.mxu0 0.0
        %375 = vmatpush1.msra.mxu0 0.0
        %376 = vmatprep.subr.mxu0 0.0
        %377 = vmatpush1.msra.mxu0 0.0
        %378 = vmatprep.subr.mxu0 0.0
        %379 = vmatpush1.msra.mxu0 0.0
        %380 = vmatprep.subr.mxu0 0.0
        %381 = vmatpush1.msra.mxu0 0.0
        %382 = vmatprep.subr.mxu0 0.0
        %383 = vmatpush1.msra.mxu0 0.0
        %384 = vmatprep.subr.mxu0 0.0
        %385 = vmatpush1.msra.mxu0 0.0
        %386 = vmatprep.subr.mxu0 0.0
        %387 = vmatpush1.msra.mxu0 0.0
        %388 = vmatprep.subr.mxu0 0.0
        %389 = vmatpush1.msra.mxu0 0.0
        %390 = vmatprep.subr.mxu0 0.0
        %391 = vmatpush1.msra.mxu0 0.0
        %392 = vmatprep.subr.mxu0 0.0
        %393 = vmatpush1.msra.mxu0 0.0
        %394 = vmatprep.subr.mxu0 0.0
        %395 = vmatpush1.msra.mxu0 0.0
        %396 = vmatprep.subr.mxu0 0.0
        %397 = vmatpush1.msra.mxu0 0.0
        %398 = vmatprep.subr.mxu0 0.0
        %399 = vmatpush1.msra.mxu0 0.0
        %400 = vmatprep.subr.mxu0 0.0
        %401 = vmatpush1.msra.mxu0 0.0
        %402 = vmatprep.subr.mxu0 0.0
        %403 = vmatpush1.msra.mxu0 0.0
        %404 = vmatprep.subr.mxu0 0.0
        %405 = vmatpush1.msra.mxu0 0.0
        %406 = vmatprep.subr.mxu0 0.0
        %407 = vmatpush1.msra.mxu0 0.0
        %408 = vmatprep.subr.mxu0 0.0
        %409 = vmatpush1.msra.mxu0 0.0
        %410 = vmatprep.subr.mxu0 0.0
        %411 = vmatpush1.msra.mxu0 0.0
        %412 = vmatprep.subr.mxu0 0.0
        %413 = vmatpush1.msra.mxu0 0.0
        %414 = vmatprep.subr.mxu0 0.0
        %415 = vmatpush1.msra.mxu0 0.0
        %416 = vmatprep.subr.mxu0 0.0
        %417 = vmatpush1.msra.mxu0 0.0
        %418 = vmatprep.subr.mxu0 0.0
        %419 = vmatpush1.msra.mxu0 0.0
        %420 = vmatprep.subr.mxu0 0.0
        %421 = vmatpush1.msra.mxu0 0.0
        %422 = vmatprep.subr.mxu0 0.0
        %423 = vmatpush1.msra.mxu0 0.0
        %424 = vmatprep.subr.mxu0 0.0
        %425 = vmatpush1.msra.mxu0 0.0
        %426 = vmatprep.subr.mxu0 0.0
        %427 = vmatpush1.msra.mxu0 0.0
        %428 = vmatprep.subr.mxu0 0.0
        %429 = vmatpush1.msra.mxu0 0.0
        %430 = vmatprep.mubr.f32.mxu0 0.0
        %431 = vmatmul.mubr.f32.gmra.mrb[0].mxu0 %v364
        %v432 = vpop.f32.mrb[0].mxu0
        %v433 = vadd.f32 0.0, %v432
        %v434 = vpop.f32.mrb[0].mxu0
        %435 = vdwg.mxu0
        %vm436 = vcmask 64512
        %437 = vst.msk [vmem:[%s319] sm:$0xff] %vm436, %v433
        %v438 = vld [vmem:[%s348] sm:$0xff]
        %v440 = vcombine.high %v438, %v438
        %v442 = vunpack.c.l.s4 1966171168
        %v443 = vunpack.c.0.s8 %v442
        %v444 = vlaneseq
        %v445 = vshrl.u32 %v444, 7
        %v446 = vsub.s32 %v443, %v445
        %v447 = vrot.slane %v438, %v446
        %v449 = vunpack.c.l.s4 1966171168
        %v450 = vunpack.c.0.s8 %v449
        %v451 = vlaneseq
        %v452 = vshrl.u32 %v451, 7
        %v453 = vsub.s32 %v450, %v452
        %v454 = vrot.slane %v440, %v453
        %v455 = vcombine.high %v447, %v447
        %v456 = vcombine.high %v454, %v454
        %v458 = vunpack.c.l.s4 1966171168
        %v459 = vunpack.c.0.s8 %v458
        %v460 = vlaneseq
        %v461 = vshrl.u32 %v460, 7
        %v462 = vsub.s32 %v459, %v461
        %v463 = vrot.slane %v447, %v462
        %v465 = vunpack.c.l.s4 1966171168
        %v466 = vunpack.c.0.s8 %v465
        %v467 = vlaneseq
        %v468 = vshrl.u32 %v467, 7
        %v469 = vsub.s32 %v466, %v468
        %v470 = vrot.slane %v454, %v469
        %v472 = vunpack.c.l.s4 1966171168
        %v473 = vunpack.c.0.s8 %v472
        %v474 = vlaneseq
        %v475 = vshrl.u32 %v474, 7
        %v476 = vsub.s32 %v473, %v475
        %v477 = vrot.slane %v455, %v476
        %v479 = vunpack.c.l.s4 1966171168
        %v480 = vunpack.c.0.s8 %v479
        %v481 = vlaneseq
        %v482 = vshrl.u32 %v481, 7
        %v483 = vsub.s32 %v480, %v482
        %v484 = vrot.slane %v456, %v483
        %v485 = vcombine.high %v463, %v463
        %v486 = vcombine.high %v470, %v470
        %v487 = vcombine.high %v477, %v477
        %v488 = vcombine.high %v484, %v484
        %v489 = vld [vmem:[%s355] sm:$0xff]
        %v490 = vlaneseq
        %v491 = vshrl.u32 %v490, 7
        %v492 = vsub.s32 0, %v491
        %v493 = vrot.slane %v463, %v492
        %v494 = vlaneseq
        %v495 = vshrl.u32 %v494, 7
        %v496 = vsub.s32 0, %v495
        %v497 = vrot.slane %v477, %v496
        %v498 = vlaneseq
        %v499 = vshrl.u32 %v498, 7
        %v500 = vsub.s32 0, %v499
        %v501 = vrot.slane %v485, %v500
        %v502 = vlaneseq
        %v503 = vshrl.u32 %v502, 7
        %v504 = vsub.s32 0, %v503
        %v505 = vrot.slane %v487, %v504
        %v506 = vlaneseq
        %v507 = vshrl.u32 %v506, 7
        %v508 = vsub.s32 0, %v507
        %v509 = vrot.slane %v470, %v508
        %v510 = vlaneseq
        %v511 = vshrl.u32 %v510, 7
        %v512 = vsub.s32 0, %v511
        %v513 = vrot.slane %v484, %v512
        %v514 = vlaneseq
        %v515 = vshrl.u32 %v514, 7
        %v516 = vsub.s32 0, %v515
        %v517 = vrot.slane %v486, %v516
        %v518 = vlaneseq
        %v519 = vshrl.u32 %v518, 7
        %v520 = vsub.s32 0, %v519
        %v521 = vrot.slane %v488, %v520
        %v530 = vadd.f32 %v493, %v489
        %v531 = vadd.f32 %v497, %v489
        %v532 = vadd.f32 %v501, %v489
        %v533 = vadd.f32 %v505, %v489
        %v534 = vadd.f32 %v509, %v489
        %v535 = vadd.f32 %v513, %v489
        %v536 = vadd.f32 %v517, %v489
        %v537 = vadd.f32 %v521, %v489
        %vm538 = vcmask 302080
        %539 = vst.msk [vmem:[%s326] sm:$0xff] %vm538, %v530
        %540 = vst.msk [vmem:[%s326 + $0x8] sm:$0xff] %vm538, %v531
        %541 = vst.msk [vmem:[%s326 + $0x10] sm:$0xff] %vm538, %v532
        %542 = vst.msk [vmem:[%s326 + $0x18] sm:$0xff] %vm538, %v533
        %543 = vst.msk [vmem:[%s326 + $0x20] sm:$0xff] %vm538, %v534
        %544 = vst.msk [vmem:[%s326 + $0x28] sm:$0xff] %vm538, %v535
        %545 = vst.msk [vmem:[%s326 + $0x30] sm:$0xff] %vm538, %v536
        %546 = vst.msk [vmem:[%s326 + $0x38] sm:$0xff] %vm538, %v537
        %s547 = sand.u32 %s166, 1
        %s548 = scalar_lea.sflag [#allocation3], %s547
        %s549 = sand.u32 %s166, 1
        %s550 = smul.addr %s549, 8
        %s551 = scalar_lea.vmem [#allocation2], %s550
        %s552 = sand.u32 %s196, 1
        %s553 = scalar_lea.sflag [#allocation5], %s552
        %s554 = sand.u32 %s196, 1
        %s555 = smul.addr %s554, 64
        %s556 = scalar_lea.vmem [#allocation4], %s555
        // Predicated region
        $region37: #{tpu_custom_call.1} parent=35 // pred_check
          %p557 = pneg %p176
        $region38: #{tpu_custom_call.1} parent=35 // pred_check_branch
          %559 = sbr.rel (%p557) target = $region40
        $region39: #{tpu_custom_call.1} parent=35 // pred_region
          %s561 = ssub.s32 128, 128
          %562 = vsyncadd %s548, %s561
          %s563 = sadd.s32 %s30, %s29
          %s564 = sadd.s32 %s563, %s28
          %s565 = smul.addr %s564, 128
          %s566 = scalar_lea.hbm %s4, %s565
          %s568 = sshll.u32 %s551, 4
          %s569 = int_to_ptr.vmem [resolvable:$true] %s568
          %571 = dma.vmem_to_hbm [thread:$0]  %s569, 128, %s566, %s548
        $region40: #{tpu_custom_call.1} parent=35 // pred_fallthru
          _
        // Predicated region
        $region41: #{tpu_custom_call.1} parent=35 // pred_check
          %p572 = pneg %p206
        $region42: #{tpu_custom_call.1} parent=35 // pred_check_branch
          %574 = sbr.rel (%p572) target = $region44
        $region43: #{tpu_custom_call.1} parent=35 // pred_region
          %s575 = smul.u32 8, %s29
          %s577 = ssub.s32 1024, 1024
          %578 = vsyncadd %s553, %s577
          %s579 = sadd.s32 %s30, %s575
          %s580 = smul.addr %s28, 8
          %s581 = sadd.s32 %s579, %s580
          %s582 = smul.addr %s581, 128
          %s583 = scalar_lea.hbm %s5, %s582
          %s584 = sshll.u32 %s556, 4
          %s585 = int_to_ptr.vmem [resolvable:$true] %s584
          %590 = dma.vmem_to_hbm [thread:$0]  %s585, 1024, %s583, %s553, 128, 128, 8
        $region44: #{tpu_custom_call.1} parent=35 // pred_fallthru
          _
      $region36: #{tpu_custom_call.1} parent=5 // pred_fallthru
        _
      %p591 = scmp.le.s32.totalorder 2, %s18
      // Predicated region
      $region45: #{tpu_custom_call.1} parent=5 // pred_check
        %p592 = pneg %p591
      $region46: #{tpu_custom_call.1} parent=5 // pred_check_branch
        %594 = sbr.rel (%p592) target = $region48
      $region47: #{tpu_custom_call.1} parent=5 // pred_region
        %s595 = ssub.s32 %s18, 2
        // Predicated region
        $region49: #{tpu_custom_call.1} parent=47 // pred_check
          %p596 = pneg %p182
        $region50: #{tpu_custom_call.1} parent=47 // pred_check_branch
          %598 = sbr.rel (%p596) target = $region52
        $region51: #{tpu_custom_call.1} parent=47 // pred_region
          %s599 = sand.u32 %s167, 1
          %s600 = scalar_lea.sflag [#allocation3], %s599
          %s601 = sand.u32 %s167, 1
          %s602 = smul.addr %s601, 8
          %s603 = scalar_lea.vmem [#allocation2], %s602
          %604 = dma.done %s600, 128
        $region52: #{tpu_custom_call.1} parent=47 // pred_fallthru
          _
        // Predicated region
        $region53: #{tpu_custom_call.1} parent=47 // pred_check
          %p605 = pneg %p212
        $region54: #{tpu_custom_call.1} parent=47 // pred_check_branch
          %607 = sbr.rel (%p605) target = $region56
        $region55: #{tpu_custom_call.1} parent=47 // pred_region
          %s608 = sand.u32 %s197, 1
          %s609 = scalar_lea.sflag [#allocation5], %s608
          %s610 = sand.u32 %s197, 1
          %s611 = smul.addr %s610, 64
          %s612 = scalar_lea.vmem [#allocation4], %s611
          %613 = dma.done %s609, 1024
        $region56: #{tpu_custom_call.1} parent=47 // pred_fallthru
          _
      $region48: #{tpu_custom_call.1} parent=5 // pred_fallthru
        _
    $region6: #{tpu_custom_call.1} parent=1 // loop_footer
      %s22 = sadd.s32 1, %s18
    $region7: #{tpu_custom_call.1} parent=1 // loop_footer_branch
      %17 = sbr.rel target = $region3
    $region8: #{tpu_custom_call.1} parent=1 // loop_exit
      _
    %614 = vsyncpa [#allocation3], 1
    %s615 = scalar_lea.sflag [#allocation3], 1
    %616 = vsyncpa %s615, 1
    %617 = vsyncpa [#allocation5], 1
    %s618 = scalar_lea.sflag [#allocation5], 1
    %619 = vsyncpa %s618, 1

</llo_original>
